<compile_context>
chip_gen: v5e
topology: v5e:2x2
jax: 0.10.0
libtpu: 0.0.40
codegen_flags: <defaults>
</compile_context>

<pallas_src>
import math

import jax
import jax.numpy as jnp
from jax.experimental import pallas as pl
from jax.experimental.pallas import tpu as pltpu

LN_EPS = 1e-5
INV_SQRT2 = 1.0 / math.sqrt(2.0)


def _round_up(x, m):
    return ((x + m - 1) // m) * m


def _erf_f32(x):
    """Abramowitz & Stegun 7.1.26 erf approximation (|err| <= 1.5e-7).

    Uses only mul/add/div/exp/where so it always lowers in Pallas TPU."""
    ax = jnp.abs(x)
    t = 1.0 / (1.0 + 0.3275911 * ax)
    poly = t * (0.254829592
                + t * (-0.284496736
                       + t * (1.421413741
                              + t * (-1.453152027
                                     + t * 1.061405429))))
    e = 1.0 - poly * jnp.exp(-ax * ax)
    return jnp.where(x < 0.0, -e, e)


def _gelu_exact(x):
    """Exact (erf-based) GELU, matching torch.nn.GELU() default."""
    return 0.5 * x * (1.0 + _erf_f32(x * INV_SQRT2))


def _make_fused_kan_kernel(num_layers):
    """Kernel applying `num_layers` KAN layers back-to-back on one batch tile.

    Ref layout (positional):
      refs[0]            : x tile            [tm, Din0]
      refs[1 + 3*l + 0]  : W_l (transposed)  [Din_l, Dout_l]   (grid-invariant)
      refs[1 + 3*l + 1]  : gamma_l           [1, Dout_l]       (grid-invariant)
      refs[1 + 3*l + 2]  : beta_l            [1, Dout_l]       (grid-invariant)
      refs[-1]           : output tile       [tm, Dout_last]
    """

    def kernel(*refs):
        x_ref = refs[0]
        o_ref = refs[-1]
        p_refs = refs[1:-1]

        x = x_ref[...].astype(jnp.float32)
        for l in range(num_layers):
            w_ref = p_refs[3 * l + 0]
            g_ref = p_refs[3 * l + 1]
            b_ref = p_refs[3 * l + 2]

            a = _gelu_exact(x)

            # Linear (no bias): GELU(x) @ W.T  (weight pre-transposed on host).
            h = jnp.dot(a, w_ref[...].astype(jnp.float32),
                        preferred_element_type=jnp.float32)

            # LayerNorm over the output-feature axis.
            mean = jnp.mean(h, axis=-1, keepdims=True)
            centered = h - mean
            var = jnp.mean(centered * centered, axis=-1, keepdims=True)
            x = (centered * jax.lax.rsqrt(var + LN_EPS)
                 * g_ref[...].astype(jnp.float32)
                 + b_ref[...].astype(jnp.float32))

        o_ref[...] = x.astype(o_ref.dtype)

    return kernel


def _default_batch_tile(batch):
    """Batch tile: multiple of 8 sublanes, >= 2 grid steps when possible
    (megacore), capped at 512 rows (amortizes per-step overhead, fits VMEM)."""
    if batch <= 8:
        return _round_up(batch, 8)
    half = -(-batch // 2)
    return min(512, _round_up(half, 8))


def kan_forward_pallas(x, prepared_params, *, tm=None):
    """Fused KAN forward.

    prepared_params: list of (W_t [Din,Dout], gamma [1,Dout], beta [1,Dout])
    produced once by prepare_params()."""
    B, Din0 = x.shape
    Dout_last = prepared_params[-1][0].shape[1]
    num_layers = len(prepared_params)

    if tm is None:
        tm = _default_batch_tile(B)
    Bp = _round_up(B, tm)
    if Bp != B:
        # Zero-pad extra rows (LayerNorm is per-row; padded rows are discarded).
        x = jnp.pad(x, ((0, Bp - B), (0, 0)))

    in_specs = [pl.BlockSpec((tm, Din0), lambda i: (i, 0))]
    flat_args = [x]
    for (w_t, gamma2, beta2) in prepared_params:
        din, dout = w_t.shape
        in_specs.append(pl.BlockSpec((din, dout), lambda i: (0, 0)))  # full W.T
        in_specs.append(pl.BlockSpec((1, dout), lambda i: (0, 0)))    # gamma
        in_specs.append(pl.BlockSpec((1, dout), lambda i: (0, 0)))    # beta
        flat_args.extend([w_t, gamma2, beta2])

    out = pl.pallas_call(
        _make_fused_kan_kernel(num_layers),
        out_shape=jax.ShapeDtypeStruct((Bp, Dout_last), x.dtype),
        grid=(Bp // tm,),
        in_specs=in_specs,
        out_specs=pl.BlockSpec((tm, Dout_last), lambda i: (i, 0)),
        compiler_params=pltpu.CompilerParams(
            dimension_semantics=("parallel",)),
    )(*flat_args)

    return out[:B]


def init_kan_params(key, layers_hidden):
    """Deterministic params matching the PyTorch __init__:
       kaiming_uniform_(nonlinearity='linear') weights, LN gamma=1, beta=0."""
    params = []
    for (din, dout) in zip(layers_hidden, layers_hidden[1:]):
        key, sub = jax.random.split(key)
        bound = math.sqrt(3.0) / math.sqrt(din)   # kaiming uniform, gain=1
        w = jax.random.uniform(sub, (dout, din), jnp.float32,
                               minval=-bound, maxval=bound)
        gamma = jnp.ones((dout,), jnp.float32)
        beta = jnp.zeros((dout,), jnp.float32)
        params.append((w, gamma, beta))
    return params


def prepare_params(params):
    """One-time host-side prep: transpose weights to [Din, Dout] and reshape
    gamma/beta to (1, Dout) so the per-forward path has no layout glue."""
    prepped = []
    for (w, gamma, beta) in params:
        dout = w.shape[0]
        prepped.append((jnp.asarray(w.T),
                        gamma.reshape(1, dout),
                        beta.reshape(1, dout)))
    return prepped


def kan_forward_ref(x, params):
    """Pure-JAX reference (exact lax.erf, HIGHEST-precision matmul)."""
    for (w, gamma, beta) in params:
        a = 0.5 * x * (1.0 + jax.lax.erf(x * INV_SQRT2))
        h = jnp.dot(a, w.T, precision=jax.lax.Precision.HIGHEST)
        mean = jnp.mean(h, axis=-1, keepdims=True)
        var = jnp.mean((h - mean) ** 2, axis=-1, keepdims=True)
        x = (h - mean) * jax.lax.rsqrt(var + LN_EPS) * gamma + beta
    return x


if __name__ == "__main__":
    layers_hidden = [32, 64, 32]
    batch = 64

    key = jax.random.PRNGKey(0)
    key, kx = jax.random.split(key)
    x = jax.random.normal(kx, (batch, layers_hidden[0]), jnp.float32)

    params = init_kan_params(key, layers_hidden)
    prepared = prepare_params(params)          # host-side, once

    fwd = jax.jit(lambda xx: kan_forward_pallas(xx, prepared))
    out = jax.block_until_ready(fwd(x))

    ref = jax.block_until_ready(kan_forward_ref(x, params))
    assert out.shape == (batch, layers_hidden[-1])
    max_err = float(jnp.max(jnp.abs(out - ref)))
    assert jnp.allclose(out, ref, atol=2e-4, rtol=2e-4), max_err

    print("KERNEL_OK")
</pallas_src>

<mosaic_0001>
module attributes {stable_mosaic.version = 11 : i64} {
  func.func @kernel(%arg0: i32, %arg1: memref<32x32xf32, #tpu.memory_space<vmem>>, %arg2: memref<32x64xf32, #tpu.memory_space<vmem>>, %arg3: memref<1x64xf32, #tpu.memory_space<vmem>>, %arg4: memref<1x64xf32, #tpu.memory_space<vmem>>, %arg5: memref<64x32xf32, #tpu.memory_space<vmem>>, %arg6: memref<1x32xf32, #tpu.memory_space<vmem>>, %arg7: memref<1x32xf32, #tpu.memory_space<vmem>>, %arg8: memref<32x32xf32, #tpu.memory_space<vmem>>) attributes {dimension_semantics = [#tpu.dimension_semantics<parallel>], iteration_bounds = array<i64: 2>, scalar_prefetch = 0 : i64, scratch_operands = 0 : i64, tpu.core_type = #tpu.core_type<tc>, window_params = [{transform_indices = @transform_0, window_bounds = array<i64: 32, 32>}, {pipeline_mode = #tpu.pipeline_mode<synchronous>, transform_indices = @transform_1, window_bounds = array<i64: 32, 64>}, {pipeline_mode = #tpu.pipeline_mode<synchronous>, transform_indices = @transform_2, window_bounds = array<i64: 1, 64>}, {pipeline_mode = #tpu.pipeline_mode<synchronous>, transform_indices = @transform_3, window_bounds = array<i64: 1, 64>}, {pipeline_mode = #tpu.pipeline_mode<synchronous>, transform_indices = @transform_4, window_bounds = array<i64: 64, 32>}, {pipeline_mode = #tpu.pipeline_mode<synchronous>, transform_indices = @transform_5, window_bounds = array<i64: 1, 32>}, {pipeline_mode = #tpu.pipeline_mode<synchronous>, transform_indices = @transform_6, window_bounds = array<i64: 1, 32>}, {transform_indices = @transform_7, window_bounds = array<i64: 32, 32>}]} {
    %c0 = arith.constant 0 : index
    %c0_0 = arith.constant 0 : index
    %0 = vector.load %arg1[%c0, %c0_0] : memref<32x32xf32, #tpu.memory_space<vmem>>, vector<32x32xf32>
    %cst = arith.constant 5.000000e-01 : f32
    %1 = vector.broadcast %cst : f32 to vector<32x32xf32>
    %2 = arith.mulf %1, %0 : vector<32x32xf32>
    %cst_1 = arith.constant 0.707106769 : f32
    %3 = vector.broadcast %cst_1 : f32 to vector<32x32xf32>
    %4 = arith.mulf %0, %3 : vector<32x32xf32>
    %5 = math.absf %4 : vector<32x32xf32>
    %cst_2 = arith.constant 0.327591091 : f32
    %6 = vector.broadcast %cst_2 : f32 to vector<32x32xf32>
    %7 = arith.mulf %6, %5 : vector<32x32xf32>
    %cst_3 = arith.constant 1.000000e+00 : f32
    %8 = vector.broadcast %cst_3 : f32 to vector<32x32xf32>
    %9 = arith.addf %8, %7 : vector<32x32xf32>
    %cst_4 = arith.constant 1.000000e+00 : f32
    %10 = vector.broadcast %cst_4 : f32 to vector<32x32xf32>
    %11 = arith.divf %10, %9 : vector<32x32xf32>
    %cst_5 = arith.constant 1.06140542 : f32
    %12 = vector.broadcast %cst_5 : f32 to vector<32x32xf32>
    %13 = arith.mulf %11, %12 : vector<32x32xf32>
    %cst_6 = arith.constant -1.45315206 : f32
    %14 = vector.broadcast %cst_6 : f32 to vector<32x32xf32>
    %15 = arith.addf %14, %13 : vector<32x32xf32>
    %16 = arith.mulf %11, %15 : vector<32x32xf32>
    %cst_7 = arith.constant 1.42141378 : f32
    %17 = vector.broadcast %cst_7 : f32 to vector<32x32xf32>
    %18 = arith.addf %17, %16 : vector<32x32xf32>
    %19 = arith.mulf %11, %18 : vector<32x32xf32>
    %cst_8 = arith.constant -0.284496725 : f32
    %20 = vector.broadcast %cst_8 : f32 to vector<32x32xf32>
    %21 = arith.addf %20, %19 : vector<32x32xf32>
    %22 = arith.mulf %11, %21 : vector<32x32xf32>
    %cst_9 = arith.constant 0.254829586 : f32
    %23 = vector.broadcast %cst_9 : f32 to vector<32x32xf32>
    %24 = arith.addf %23, %22 : vector<32x32xf32>
    %25 = arith.mulf %11, %24 : vector<32x32xf32>
    %cst_10 = arith.constant 0.000000e+00 : f32
    %26 = vector.broadcast %cst_10 : f32 to vector<32x32xf32>
    %27 = arith.subf %26, %5 : vector<32x32xf32>
    %28 = arith.mulf %27, %5 : vector<32x32xf32>
    %29 = math.exp %28 : vector<32x32xf32>
    %30 = arith.mulf %25, %29 : vector<32x32xf32>
    %cst_11 = arith.constant 1.000000e+00 : f32
    %31 = vector.broadcast %cst_11 : f32 to vector<32x32xf32>
    %32 = arith.subf %31, %30 : vector<32x32xf32>
    %cst_12 = arith.constant 0.000000e+00 : f32
    %33 = vector.broadcast %cst_12 : f32 to vector<32x32xf32>
    %34 = arith.cmpf olt, %4, %33 : vector<32x32xf32>
    %cst_13 = arith.constant 0.000000e+00 : f32
    %35 = vector.broadcast %cst_13 : f32 to vector<32x32xf32>
    %36 = arith.subf %35, %32 : vector<32x32xf32>
    %37 = arith.select %34, %36, %32 : vector<32x32xi1>, vector<32x32xf32>
    %cst_14 = arith.constant 1.000000e+00 : f32
    %38 = vector.broadcast %cst_14 : f32 to vector<32x32xf32>
    %39 = arith.addf %38, %37 : vector<32x32xf32>
    %40 = arith.mulf %2, %39 : vector<32x32xf32>
    %c0_15 = arith.constant 0 : index
    %c0_16 = arith.constant 0 : index
    %41 = vector.load %arg2[%c0_15, %c0_16] : memref<32x64xf32, #tpu.memory_space<vmem>>, vector<32x64xf32>
    %cst_17 = arith.constant dense<0.000000e+00> : vector<32x64xf32>
    %42 = tpu.matmul %40, %41, %cst_17 {dimension_numbers = #tpu.dot_dimension_numbers<[1], [0], [0], [1], [0, 0, 1, 1], [], []>} : vector<32x32xf32>, vector<32x64xf32>, vector<32x64xf32> -> vector<32x64xf32>
    %cst_18 = arith.constant dense<0.000000e+00> : vector<32xf32>
    %43 = vector.multi_reduction <add>, %42, %cst_18 [1] : vector<32x64xf32> to vector<32xf32>
    %44 = vector.shape_cast %43 : vector<32xf32> to vector<32x1xf32>
    %cst_19 = arith.constant 6.400000e+01 : f32
    %45 = vector.broadcast %cst_19 : f32 to vector<32x1xf32>
    %46 = arith.divf %44, %45 : vector<32x1xf32>
    %47 = vector.broadcast %46 : vector<32x1xf32> to vector<32x64xf32>
    %48 = arith.subf %42, %47 : vector<32x64xf32>
    %49 = arith.mulf %48, %48 : vector<32x64xf32>
    %cst_20 = arith.constant dense<0.000000e+00> : vector<32xf32>
    %50 = vector.multi_reduction <add>, %49, %cst_20 [1] : vector<32x64xf32> to vector<32xf32>
    %51 = vector.shape_cast %50 : vector<32xf32> to vector<32x1xf32>
    %cst_21 = arith.constant 6.400000e+01 : f32
    %52 = vector.broadcast %cst_21 : f32 to vector<32x1xf32>
    %53 = arith.divf %51, %52 : vector<32x1xf32>
    %cst_22 = arith.constant 9.99999974E-6 : f32
    %54 = vector.broadcast %cst_22 : f32 to vector<32x1xf32>
    %55 = arith.addf %53, %54 : vector<32x1xf32>
    %56 = math.rsqrt %55 : vector<32x1xf32>
    %57 = vector.broadcast %56 : vector<32x1xf32> to vector<32x64xf32>
    %58 = arith.mulf %48, %57 : vector<32x64xf32>
    %c0_23 = arith.constant 0 : index
    %c0_24 = arith.constant 0 : index
    %59 = vector.load %arg3[%c0_23, %c0_24] : memref<1x64xf32, #tpu.memory_space<vmem>>, vector<1x64xf32>
    %60 = vector.broadcast %59 : vector<1x64xf32> to vector<32x64xf32>
    %61 = arith.mulf %58, %60 : vector<32x64xf32>
    %c0_25 = arith.constant 0 : index
    %c0_26 = arith.constant 0 : index
    %62 = vector.load %arg4[%c0_25, %c0_26] : memref<1x64xf32, #tpu.memory_space<vmem>>, vector<1x64xf32>
    %63 = vector.broadcast %62 : vector<1x64xf32> to vector<32x64xf32>
    %64 = arith.addf %61, %63 : vector<32x64xf32>
    %cst_27 = arith.constant 5.000000e-01 : f32
    %65 = vector.broadcast %cst_27 : f32 to vector<32x64xf32>
    %66 = arith.mulf %65, %64 : vector<32x64xf32>
    %cst_28 = arith.constant 0.707106769 : f32
    %67 = vector.broadcast %cst_28 : f32 to vector<32x64xf32>
    %68 = arith.mulf %64, %67 : vector<32x64xf32>
    %69 = math.absf %68 : vector<32x64xf32>
    %cst_29 = arith.constant 0.327591091 : f32
    %70 = vector.broadcast %cst_29 : f32 to vector<32x64xf32>
    %71 = arith.mulf %70, %69 : vector<32x64xf32>
    %cst_30 = arith.constant 1.000000e+00 : f32
    %72 = vector.broadcast %cst_30 : f32 to vector<32x64xf32>
    %73 = arith.addf %72, %71 : vector<32x64xf32>
    %cst_31 = arith.constant 1.000000e+00 : f32
    %74 = vector.broadcast %cst_31 : f32 to vector<32x64xf32>
    %75 = arith.divf %74, %73 : vector<32x64xf32>
    %cst_32 = arith.constant 1.06140542 : f32
    %76 = vector.broadcast %cst_32 : f32 to vector<32x64xf32>
    %77 = arith.mulf %75, %76 : vector<32x64xf32>
    %cst_33 = arith.constant -1.45315206 : f32
    %78 = vector.broadcast %cst_33 : f32 to vector<32x64xf32>
    %79 = arith.addf %78, %77 : vector<32x64xf32>
    %80 = arith.mulf %75, %79 : vector<32x64xf32>
    %cst_34 = arith.constant 1.42141378 : f32
    %81 = vector.broadcast %cst_34 : f32 to vector<32x64xf32>
    %82 = arith.addf %81, %80 : vector<32x64xf32>
    %83 = arith.mulf %75, %82 : vector<32x64xf32>
    %cst_35 = arith.constant -0.284496725 : f32
    %84 = vector.broadcast %cst_35 : f32 to vector<32x64xf32>
    %85 = arith.addf %84, %83 : vector<32x64xf32>
    %86 = arith.mulf %75, %85 : vector<32x64xf32>
    %cst_36 = arith.constant 0.254829586 : f32
    %87 = vector.broadcast %cst_36 : f32 to vector<32x64xf32>
    %88 = arith.addf %87, %86 : vector<32x64xf32>
    %89 = arith.mulf %75, %88 : vector<32x64xf32>
    %cst_37 = arith.constant 0.000000e+00 : f32
    %90 = vector.broadcast %cst_37 : f32 to vector<32x64xf32>
    %91 = arith.subf %90, %69 : vector<32x64xf32>
    %92 = arith.mulf %91, %69 : vector<32x64xf32>
    %93 = math.exp %92 : vector<32x64xf32>
    %94 = arith.mulf %89, %93 : vector<32x64xf32>
    %cst_38 = arith.constant 1.000000e+00 : f32
    %95 = vector.broadcast %cst_38 : f32 to vector<32x64xf32>
    %96 = arith.subf %95, %94 : vector<32x64xf32>
    %cst_39 = arith.constant 0.000000e+00 : f32
    %97 = vector.broadcast %cst_39 : f32 to vector<32x64xf32>
    %98 = arith.cmpf olt, %68, %97 : vector<32x64xf32>
    %cst_40 = arith.constant 0.000000e+00 : f32
    %99 = vector.broadcast %cst_40 : f32 to vector<32x64xf32>
    %100 = arith.subf %99, %96 : vector<32x64xf32>
    %101 = arith.select %98, %100, %96 : vector<32x64xi1>, vector<32x64xf32>
    %cst_41 = arith.constant 1.000000e+00 : f32
    %102 = vector.broadcast %cst_41 : f32 to vector<32x64xf32>
    %103 = arith.addf %102, %101 : vector<32x64xf32>
    %104 = arith.mulf %66, %103 : vector<32x64xf32>
    %c0_42 = arith.constant 0 : index
    %c0_43 = arith.constant 0 : index
    %105 = vector.load %arg5[%c0_42, %c0_43] : memref<64x32xf32, #tpu.memory_space<vmem>>, vector<64x32xf32>
    %cst_44 = arith.constant dense<0.000000e+00> : vector<32x32xf32>
    %106 = tpu.matmul %104, %105, %cst_44 {dimension_numbers = #tpu.dot_dimension_numbers<[1], [0], [0], [1], [0, 0, 1, 1], [], []>} : vector<32x64xf32>, vector<64x32xf32>, vector<32x32xf32> -> vector<32x32xf32>
    %cst_45 = arith.constant dense<0.000000e+00> : vector<32xf32>
    %107 = vector.multi_reduction <add>, %106, %cst_45 [1] : vector<32x32xf32> to vector<32xf32>
    %108 = vector.shape_cast %107 : vector<32xf32> to vector<32x1xf32>
    %cst_46 = arith.constant 3.200000e+01 : f32
    %109 = vector.broadcast %cst_46 : f32 to vector<32x1xf32>
    %110 = arith.divf %108, %109 : vector<32x1xf32>
    %111 = vector.broadcast %110 : vector<32x1xf32> to vector<32x32xf32>
    %112 = arith.subf %106, %111 : vector<32x32xf32>
    %113 = arith.mulf %112, %112 : vector<32x32xf32>
    %cst_47 = arith.constant dense<0.000000e+00> : vector<32xf32>
    %114 = vector.multi_reduction <add>, %113, %cst_47 [1] : vector<32x32xf32> to vector<32xf32>
    %115 = vector.shape_cast %114 : vector<32xf32> to vector<32x1xf32>
    %cst_48 = arith.constant 3.200000e+01 : f32
    %116 = vector.broadcast %cst_48 : f32 to vector<32x1xf32>
    %117 = arith.divf %115, %116 : vector<32x1xf32>
    %cst_49 = arith.constant 9.99999974E-6 : f32
    %118 = vector.broadcast %cst_49 : f32 to vector<32x1xf32>
    %119 = arith.addf %117, %118 : vector<32x1xf32>
    %120 = math.rsqrt %119 : vector<32x1xf32>
    %121 = vector.broadcast %120 : vector<32x1xf32> to vector<32x32xf32>
    %122 = arith.mulf %112, %121 : vector<32x32xf32>
    %c0_50 = arith.constant 0 : index
    %c0_51 = arith.constant 0 : index
    %123 = vector.load %arg6[%c0_50, %c0_51] : memref<1x32xf32, #tpu.memory_space<vmem>>, vector<1x32xf32>
    %124 = vector.broadcast %123 : vector<1x32xf32> to vector<32x32xf32>
    %125 = arith.mulf %122, %124 : vector<32x32xf32>
    %c0_52 = arith.constant 0 : index
    %c0_53 = arith.constant 0 : index
    %126 = vector.load %arg7[%c0_52, %c0_53] : memref<1x32xf32, #tpu.memory_space<vmem>>, vector<1x32xf32>
    %127 = vector.broadcast %126 : vector<1x32xf32> to vector<32x32xf32>
    %128 = arith.addf %125, %127 : vector<32x32xf32>
    %c0_54 = arith.constant 0 : index
    %c0_55 = arith.constant 0 : index
    %129 = vector.load %arg8[%c0_54, %c0_55] : memref<32x32xf32, #tpu.memory_space<vmem>>, vector<32x32xf32>
    tpu.vector_store %arg8[%c0_54, %c0_55], %128 {strides = array<i32>} : memref<32x32xf32, #tpu.memory_space<vmem>>, vector<32x32xf32>,
    return
  }
  func.func @transform_0(%arg0: i32) -> (i32, i32) {
    %c0_i32 = arith.constant 0 : i32
    %c0_i32_0 = arith.constant 0 : i32
    return %arg0, %c0_i32 : i32, i32
  }
  func.func @transform_1(%arg0: i32) -> (i32, i32) {
    %c0_i32 = arith.constant 0 : i32
    %c0_i32_0 = arith.constant 0 : i32
    %c0_i32_1 = arith.constant 0 : i32
    return %c0_i32, %c0_i32_0 : i32, i32
  }
  func.func @transform_2(%arg0: i32) -> (i32, i32) {
    %c0_i32 = arith.constant 0 : i32
    %c0_i32_0 = arith.constant 0 : i32
    %c0_i32_1 = arith.constant 0 : i32
    return %c0_i32, %c0_i32_0 : i32, i32
  }
  func.func @transform_3(%arg0: i32) -> (i32, i32) {
    %c0_i32 = arith.constant 0 : i32
    %c0_i32_0 = arith.constant 0 : i32
    %c0_i32_1 = arith.constant 0 : i32
    return %c0_i32, %c0_i32_0 : i32, i32
  }
  func.func @transform_4(%arg0: i32) -> (i32, i32) {
    %c0_i32 = arith.constant 0 : i32
    %c0_i32_0 = arith.constant 0 : i32
    %c0_i32_1 = arith.constant 0 : i32
    return %c0_i32, %c0_i32_0 : i32, i32
  }
  func.func @transform_5(%arg0: i32) -> (i32, i32) {
    %c0_i32 = arith.constant 0 : i32
    %c0_i32_0 = arith.constant 0 : i32
    %c0_i32_1 = arith.constant 0 : i32
    return %c0_i32, %c0_i32_0 : i32, i32
  }
  func.func @transform_6(%arg0: i32) -> (i32, i32) {
    %c0_i32 = arith.constant 0 : i32
    %c0_i32_0 = arith.constant 0 : i32
    %c0_i32_1 = arith.constant 0 : i32
    return %c0_i32, %c0_i32_0 : i32, i32
  }
  func.func @transform_7(%arg0: i32) -> (i32, i32) {
    %c0_i32 = arith.constant 0 : i32
    %c0_i32_0 = arith.constant 0 : i32
    return %arg0, %c0_i32 : i32, i32
  }
}

</mosaic_0001>

<llo_original>
// kernel: _lambda_.1
$region0: #{_lambda_.1}
  #allocation0 [shape = 'u32[]', space=smem, size = 0x4, offset = 0x4, fixed_abs, tag = 'smem constant byte address 0x4 - core index']
  #allocation1 [shape = 'u32[72,128]{1,0:T(1,128)}', space=vmem, size = 0x9000, scoped, tag = 'internal scratch']
  %s0 = inlined_call_operand.vmem [shape: f32[64,32], index: 0, kind: input, shape index: {}]
  %s1 = inlined_call_operand.vmem [shape: f32[32,64], index: 1, kind: input, shape index: {}]
  %s2 = inlined_call_operand.vmem [shape: f32[1,64], index: 2, kind: input, shape index: {}]
  %s3 = inlined_call_operand.vmem [shape: f32[1,64], index: 3, kind: input, shape index: {}]
  %s4 = inlined_call_operand.vmem [shape: f32[64,32], index: 4, kind: input, shape index: {}]
  %s5 = inlined_call_operand.vmem [shape: f32[1,32], index: 5, kind: input, shape index: {}]
  %s6 = inlined_call_operand.vmem [shape: f32[1,32], index: 6, kind: input, shape index: {}]
  %s7 = inlined_call_operand.vmem [shape: f32[64,32], index: 7, kind: output, shape index: {}]
  %s8 = sld [smem:[#allocation0]]
  $region61: #{_lambda_.1} parent=0
    _
  %s10 = ssub.s32 1, %s8
  %s11 = scalar_select 0, %s10, %s8
  loop: start=0, step=1, limit=4
  $region2: #{_lambda_.1} parent=0 // loop_pre_header
    _
  $region3: #{_lambda_.1} parent=0 // loop_header
    %s13 = sphi 0, %s17
    %p14 = scmp.ge.s32.totalorder %s13, 4
    %s23 = sphi 0, %s25
    %s26 = sphi 0, %s23
    %s27 = sphi 0, %s26
    %s43 = sphi 0, %s27
    %s47 = sphi 0, %s47
    %s49 = sphi 0, %s47
    %s50 = sphi 0, %s49
    %s64 = sphi 0, %s50
    %s68 = sphi 0, %s68
    %s70 = sphi 0, %s68
    %s71 = sphi 0, %s70
    %s85 = sphi 0, %s71
    %s89 = sphi 0, %s89
    %s91 = sphi 0, %s89
    %s92 = sphi 0, %s91
    %s106 = sphi 0, %s92
    %s110 = sphi 0, %s110
    %s112 = sphi 0, %s110
    %s113 = sphi 0, %s112
    %s127 = sphi 0, %s113
    %s131 = sphi 0, %s131
    %s133 = sphi 0, %s131
    %s134 = sphi 0, %s133
    %s148 = sphi 0, %s134
    %s152 = sphi 0, %s152
    %s154 = sphi 0, %s152
    %s155 = sphi 0, %s154
    %s169 = sphi 0, %s155
    %s175 = sphi 0, %s177
    %s178 = sphi 0, %s175
    %s179 = sphi 0, %s178
    %s195 = sphi 0, %s179
  $region4: #{_lambda_.1} parent=0 // loop_header_branch
    %16 = sbr.rel (%p14) target = $region8
  $region5: #{_lambda_.1} parent=0 // loop_body
    %s18 = ssub.s32 %s13, 1
    %s19 = ssub.s32 %s13, 2
    %s20 = sadd.s32 %s13, 1
    %s21 = ssub.s32 %s13, %s20
    %p22 = scmp.eq.s32.totalorder %s21, 0
    %s24 = sadd.s32 %s23, 1
    %s25 = scalar_select %p22, %s23, %s24
    %p28 = pneg %p22
    %p29 = scmp.eq.s32.totalorder %s13, 1
    %p30 = por %p28, %p29
    %p31 = scmp.ne.s32.totalorder %s23, %s26
    %p32 = scmp.eq.s32.totalorder %s13, 0
    %p33 = por %p31, %p32
    %p34 = scmp.ne.s32.totalorder %s23, %s26
    %p35 = scmp.eq.s32.totalorder %s18, 1
    %p36 = por %p34, %p35
    %p37 = scmp.ne.s32.totalorder %s26, %s27
    %p38 = scmp.eq.s32.totalorder %s18, 0
    %p39 = por %p37, %p38
    %p40 = scmp.ne.s32.totalorder %s26, %s27
    %p41 = scmp.eq.s32.totalorder %s19, 1
    %p42 = por %p40, %p41
    %p44 = scmp.ne.s32.totalorder %s27, %s43
    %p45 = scmp.eq.s32.totalorder %s19, 0
    %p46 = por %p44, %p45
    %s48 = sadd.s32 %s47, 1
    %p51 = scmp.eq.s32.totalorder %s13, 1
    %p52 = scmp.ne.s32.totalorder %s47, %s49
    %p53 = scmp.eq.s32.totalorder %s13, 0
    %p54 = por %p52, %p53
    %p55 = scmp.ne.s32.totalorder %s47, %s49
    %p56 = scmp.eq.s32.totalorder %s18, 1
    %p57 = por %p55, %p56
    %p58 = scmp.ne.s32.totalorder %s49, %s50
    %p59 = scmp.eq.s32.totalorder %s18, 0
    %p60 = por %p58, %p59
    %p61 = scmp.ne.s32.totalorder %s49, %s50
    %p62 = scmp.eq.s32.totalorder %s19, 1
    %p63 = por %p61, %p62
    %p65 = scmp.ne.s32.totalorder %s50, %s64
    %p66 = scmp.eq.s32.totalorder %s19, 0
    %p67 = por %p65, %p66
    %s69 = sadd.s32 %s68, 1
    %p72 = scmp.eq.s32.totalorder %s13, 1
    %p73 = scmp.ne.s32.totalorder %s68, %s70
    %p74 = scmp.eq.s32.totalorder %s13, 0
    %p75 = por %p73, %p74
    %p76 = scmp.ne.s32.totalorder %s68, %s70
    %p77 = scmp.eq.s32.totalorder %s18, 1
    %p78 = por %p76, %p77
    %p79 = scmp.ne.s32.totalorder %s70, %s71
    %p80 = scmp.eq.s32.totalorder %s18, 0
    %p81 = por %p79, %p80
    %p82 = scmp.ne.s32.totalorder %s70, %s71
    %p83 = scmp.eq.s32.totalorder %s19, 1
    %p84 = por %p82, %p83
    %p86 = scmp.ne.s32.totalorder %s71, %s85
    %p87 = scmp.eq.s32.totalorder %s19, 0
    %p88 = por %p86, %p87
    %s90 = sadd.s32 %s89, 1
    %p93 = scmp.eq.s32.totalorder %s13, 1
    %p94 = scmp.ne.s32.totalorder %s89, %s91
    %p95 = scmp.eq.s32.totalorder %s13, 0
    %p96 = por %p94, %p95
    %p97 = scmp.ne.s32.totalorder %s89, %s91
    %p98 = scmp.eq.s32.totalorder %s18, 1
    %p99 = por %p97, %p98
    %p100 = scmp.ne.s32.totalorder %s91, %s92
    %p101 = scmp.eq.s32.totalorder %s18, 0
    %p102 = por %p100, %p101
    %p103 = scmp.ne.s32.totalorder %s91, %s92
    %p104 = scmp.eq.s32.totalorder %s19, 1
    %p105 = por %p103, %p104
    %p107 = scmp.ne.s32.totalorder %s92, %s106
    %p108 = scmp.eq.s32.totalorder %s19, 0
    %p109 = por %p107, %p108
    %s111 = sadd.s32 %s110, 1
    %p114 = scmp.eq.s32.totalorder %s13, 1
    %p115 = scmp.ne.s32.totalorder %s110, %s112
    %p116 = scmp.eq.s32.totalorder %s13, 0
    %p117 = por %p115, %p116
    %p118 = scmp.ne.s32.totalorder %s110, %s112
    %p119 = scmp.eq.s32.totalorder %s18, 1
    %p120 = por %p118, %p119
    %p121 = scmp.ne.s32.totalorder %s112, %s113
    %p122 = scmp.eq.s32.totalorder %s18, 0
    %p123 = por %p121, %p122
    %p124 = scmp.ne.s32.totalorder %s112, %s113
    %p125 = scmp.eq.s32.totalorder %s19, 1
    %p126 = por %p124, %p125
    %p128 = scmp.ne.s32.totalorder %s113, %s127
    %p129 = scmp.eq.s32.totalorder %s19, 0
    %p130 = por %p128, %p129
    %s132 = sadd.s32 %s131, 1
    %p135 = scmp.eq.s32.totalorder %s13, 1
    %p136 = scmp.ne.s32.totalorder %s131, %s133
    %p137 = scmp.eq.s32.totalorder %s13, 0
    %p138 = por %p136, %p137
    %p139 = scmp.ne.s32.totalorder %s131, %s133
    %p140 = scmp.eq.s32.totalorder %s18, 1
    %p141 = por %p139, %p140
    %p142 = scmp.ne.s32.totalorder %s133, %s134
    %p143 = scmp.eq.s32.totalorder %s18, 0
    %p144 = por %p142, %p143
    %p145 = scmp.ne.s32.totalorder %s133, %s134
    %p146 = scmp.eq.s32.totalorder %s19, 1
    %p147 = por %p145, %p146
    %p149 = scmp.ne.s32.totalorder %s134, %s148
    %p150 = scmp.eq.s32.totalorder %s19, 0
    %p151 = por %p149, %p150
    %s153 = sadd.s32 %s152, 1
    %p156 = scmp.eq.s32.totalorder %s13, 1
    %p157 = scmp.ne.s32.totalorder %s152, %s154
    %p158 = scmp.eq.s32.totalorder %s13, 0
    %p159 = por %p157, %p158
    %p160 = scmp.ne.s32.totalorder %s152, %s154
    %p161 = scmp.eq.s32.totalorder %s18, 1
    %p162 = por %p160, %p161
    %p163 = scmp.ne.s32.totalorder %s154, %s155
    %p164 = scmp.eq.s32.totalorder %s18, 0
    %p165 = por %p163, %p164
    %p166 = scmp.ne.s32.totalorder %s154, %s155
    %p167 = scmp.eq.s32.totalorder %s19, 1
    %p168 = por %p166, %p167
    %p170 = scmp.ne.s32.totalorder %s155, %s169
    %p171 = scmp.eq.s32.totalorder %s19, 0
    %p172 = por %p170, %p171
    %s173 = ssub.s32 %s13, %s20
    %p174 = scmp.eq.s32.totalorder %s173, 0
    %s176 = sadd.s32 %s175, 1
    %s177 = scalar_select %p174, %s175, %s176
    %p180 = pneg %p174
    %p181 = scmp.eq.s32.totalorder %s13, 1
    %p182 = por %p180, %p181
    %p183 = scmp.ne.s32.totalorder %s175, %s178
    %p184 = scmp.eq.s32.totalorder %s13, 0
    %p185 = por %p183, %p184
    %p186 = scmp.ne.s32.totalorder %s175, %s178
    %p187 = scmp.eq.s32.totalorder %s18, 1
    %p188 = por %p186, %p187
    %p189 = scmp.ne.s32.totalorder %s178, %s179
    %p190 = scmp.eq.s32.totalorder %s18, 0
    %p191 = por %p189, %p190
    %p192 = scmp.ne.s32.totalorder %s178, %s179
    %p193 = scmp.eq.s32.totalorder %s19, 1
    %p194 = por %p192, %p193
    %p196 = scmp.ne.s32.totalorder %s179, %s195
    %p197 = scmp.eq.s32.totalorder %s19, 0
    %p198 = por %p196, %p197
    %p199 = scmp.le.s32.totalorder 1, %s13
    %p200 = scmp.lt.s32.totalorder %s13, 3
    %p201 = pnand %p199, %p200
    %p202 = pneg %p201
    // Predicated region
    $region9: #{_lambda_.1} parent=5 // pred_check
      _
    $region10: #{_lambda_.1} parent=5 // pred_check_branch
      %204 = sbr.rel (%p201) target = $region12
    $region11: #{_lambda_.1} parent=5 // pred_region
      %s205 = ssub.s32 %s13, 1
      // Predicated region
      $region13: #{_lambda_.1} parent=11 // pred_check
        %p206 = pneg %p60
      $region14: #{_lambda_.1} parent=11 // pred_check_branch
        %208 = sbr.rel (%p206) target = $region16
      $region15: #{_lambda_.1} parent=11 // pred_region
        _
      $region16: #{_lambda_.1} parent=11 // pred_fallthru
        _
      // Predicated region
      $region17: #{_lambda_.1} parent=11 // pred_check
        %p209 = pneg %p81
      $region18: #{_lambda_.1} parent=11 // pred_check_branch
        %211 = sbr.rel (%p209) target = $region20
      $region19: #{_lambda_.1} parent=11 // pred_region
        _
      $region20: #{_lambda_.1} parent=11 // pred_fallthru
        _
      // Predicated region
      $region21: #{_lambda_.1} parent=11 // pred_check
        %p212 = pneg %p102
      $region22: #{_lambda_.1} parent=11 // pred_check_branch
        %214 = sbr.rel (%p212) target = $region24
      $region23: #{_lambda_.1} parent=11 // pred_region
        _
      $region24: #{_lambda_.1} parent=11 // pred_fallthru
        _
      // Predicated region
      $region25: #{_lambda_.1} parent=11 // pred_check
        %p215 = pneg %p123
      $region26: #{_lambda_.1} parent=11 // pred_check_branch
        %217 = sbr.rel (%p215) target = $region28
      $region27: #{_lambda_.1} parent=11 // pred_region
        _
      $region28: #{_lambda_.1} parent=11 // pred_fallthru
        _
      // Predicated region
      $region29: #{_lambda_.1} parent=11 // pred_check
        %p218 = pneg %p144
      $region30: #{_lambda_.1} parent=11 // pred_check_branch
        %220 = sbr.rel (%p218) target = $region32
      $region31: #{_lambda_.1} parent=11 // pred_region
        _
      $region32: #{_lambda_.1} parent=11 // pred_fallthru
        _
      // Predicated region
      $region33: #{_lambda_.1} parent=11 // pred_check
        %p221 = pneg %p165
      $region34: #{_lambda_.1} parent=11 // pred_check_branch
        %223 = sbr.rel (%p221) target = $region36
      $region35: #{_lambda_.1} parent=11 // pred_region
        _
      $region36: #{_lambda_.1} parent=11 // pred_fallthru
        _
    $region12: #{_lambda_.1} parent=5 // pred_fallthru
      _
    %p224 = scmp.lt.s32.totalorder %s13, 2
    // Predicated region
    $region37: #{_lambda_.1} parent=5 // pred_check
      %p225 = pneg %p224
    $region38: #{_lambda_.1} parent=5 // pred_check_branch
      %227 = sbr.rel (%p225) target = $region40
    $region39: #{_lambda_.1} parent=5 // pred_region
      // Predicated region
      $region41: #{_lambda_.1} parent=39 // pred_check
        %p228 = pneg %p33
      $region42: #{_lambda_.1} parent=39 // pred_check_branch
        %230 = sbr.rel (%p228) target = $region44
      $region43: #{_lambda_.1} parent=39 // pred_region
        %s231 = smul.u32 4, %s13
        %p232 = scmp.lt.s32.totalorder %s231, 7
        %s233 = scalar_select %p232, %s231, 7
        %s234 = smul.addr %s233, 8
        %s235 = scalar_lea.vmem %s0, %s234
        %s236 = smul.u32 4, %s13
      $region44: #{_lambda_.1} parent=39 // pred_fallthru
        _
    $region40: #{_lambda_.1} parent=5 // pred_fallthru
      _
    %p237 = scmp.le.s32.totalorder 1, %s13
    %p238 = scmp.lt.s32.totalorder %s13, 3
    %p239 = pnand %p237, %p238
    %p240 = pneg %p239
    // Predicated region
    $region45: #{_lambda_.1} parent=5 // pred_check
      _
    $region46: #{_lambda_.1} parent=5 // pred_check_branch
      %242 = sbr.rel (%p239) target = $region48
    $region47: #{_lambda_.1} parent=5 // pred_region
      %s243 = ssub.s32 %s13, 1
      %s244 = smul.u32 4, %s18
      %p245 = scmp.lt.s32.totalorder %s244, 7
      %s246 = scalar_select %p245, %s244, 7
      %s247 = smul.addr %s246, 8
      %s248 = scalar_lea.vmem %s0, %s247
      %p249 = pneg %p39
      %p250 = pneg %p36
      %p251 = pneg %p60
      %p252 = pneg %p57
      %p253 = pneg %p81
      %p254 = pneg %p78
      %p255 = pneg %p102
      %p256 = pneg %p99
      %p257 = pneg %p123
      %p258 = pneg %p120
      %p259 = pneg %p144
      %p260 = pneg %p141
      %p261 = pneg %p165
      %p262 = pneg %p162
      %p263 = pneg %p191
      %p264 = pneg %p188
      %s265 = smul.u32 4, %s18
      %p266 = scmp.lt.s32.totalorder %s265, 7
      %s267 = scalar_select %p266, %s265, 7
      %s268 = smul.addr %s267, 8
      %s269 = scalar_lea.vmem %s7, %s268
      %s270 = smul.u32 4, %s18
      %p271 = scmp.lt.s32.totalorder %s270, 7
      %s272 = scalar_select %p271, %s270, 7
      %s273 = smul.addr %s272, 8
      %s274 = scalar_lea.vmem %s0, %s273
      %s275 = smul.u32 4, %s18
      %s276 = smul.u32 4, %s18
      %p277 = scmp.lt.s32.totalorder %s276, 7
      %s278 = scalar_select %p277, %s276, 7
      %s279 = smul.addr %s278, 8
      %s280 = scalar_lea.vmem %s7, %s279
      %s281 = smul.u32 4, %s18
      %v282 = vld [vmem:[%s274] sm:$0xff]
      %v283 = vld [vmem:[%s274 + $0x8] sm:$0xff]
      %v284 = vld [vmem:[%s274 + $0x10] sm:$0xff]
      %v285 = vld [vmem:[%s274 + $0x18] sm:$0xff]
      %v286 = vmul.f32 %v282, 0.5
      %v287 = vmul.f32 %v283, 0.5
      %v288 = vmul.f32 %v284, 0.5
      %v289 = vmul.f32 %v285, 0.5
      %v290 = vmul.f32 %v282, 0.70710677
      %v291 = vmul.f32 %v283, 0.70710677
      %v292 = vmul.f32 %v284, 0.70710677
      %v293 = vmul.f32 %v285, 0.70710677
      %v294 = vand.u32 2147483647, %v290
      %v295 = vand.u32 2147483647, %v291
      %v296 = vand.u32 2147483647, %v292
      %v297 = vand.u32 2147483647, %v293
      %v298 = vmul.f32 %v294, 0.3275911
      %v299 = vmul.f32 %v295, 0.3275911
      %v300 = vmul.f32 %v296, 0.3275911
      %v301 = vmul.f32 %v297, 0.3275911
      %v302 = vadd.f32 %v298, 1.0
      %v303 = vadd.f32 %v299, 1.0
      %v304 = vadd.f32 %v300, 1.0
      %v305 = vadd.f32 %v301, 1.0
      %v306 = vrcp.pop %v302
      %v307 = vmul.f32 %v302, %v306
      %v308 = vsub.f32 1.0, %v307
      %v309 = vmul.f32 %v306, %v308
      %v310 = vadd.f32 %v306, %v309
      %vm311 = vweird.f32 %v302
      %vm312 = vweird.f32 %v306
      %vm313 = vmor %vm311, %vm312
      %v314 = vsel %vm313, %v306, %v310
      %v315 = vand.u32 2147483647, %v302
      %vm316 = vcmp.eq.f32.partialorder %v315, 8.507059e+37
      %v317 = vand.u32 %v302, 2147483648
      %v318 = vor.u32 1.1754944e-38, %v317
      %v319 = vsel %vm316, %v318, %v314
      %v320 = vmul.f32 1.0, %v319
      %v321 = vrcp.pop %v303
      %v322 = vmul.f32 %v303, %v321
      %v323 = vsub.f32 1.0, %v322
      %v324 = vmul.f32 %v321, %v323
      %v325 = vadd.f32 %v321, %v324
      %vm326 = vweird.f32 %v303
      %vm327 = vweird.f32 %v321
      %vm328 = vmor %vm326, %vm327
      %v329 = vsel %vm328, %v321, %v325
      %v330 = vand.u32 2147483647, %v303
      %vm331 = vcmp.eq.f32.partialorder %v330, 8.507059e+37
      %v332 = vand.u32 %v303, 2147483648
      %v333 = vor.u32 1.1754944e-38, %v332
      %v334 = vsel %vm331, %v333, %v329
      %v335 = vmul.f32 1.0, %v334
      %v336 = vrcp.pop %v304
      %v337 = vmul.f32 %v304, %v336
      %v338 = vsub.f32 1.0, %v337
      %v339 = vmul.f32 %v336, %v338
      %v340 = vadd.f32 %v336, %v339
      %vm341 = vweird.f32 %v304
      %vm342 = vweird.f32 %v336
      %vm343 = vmor %vm341, %vm342
      %v344 = vsel %vm343, %v336, %v340
      %v345 = vand.u32 2147483647, %v304
      %vm346 = vcmp.eq.f32.partialorder %v345, 8.507059e+37
      %v347 = vand.u32 %v304, 2147483648
      %v348 = vor.u32 1.1754944e-38, %v347
      %v349 = vsel %vm346, %v348, %v344
      %v350 = vmul.f32 1.0, %v349
      %v351 = vrcp.pop %v305
      %v352 = vmul.f32 %v305, %v351
      %v353 = vsub.f32 1.0, %v352
      %v354 = vmul.f32 %v351, %v353
      %v355 = vadd.f32 %v351, %v354
      %vm356 = vweird.f32 %v305
      %vm357 = vweird.f32 %v351
      %vm358 = vmor %vm356, %vm357
      %v359 = vsel %vm358, %v351, %v355
      %v360 = vand.u32 2147483647, %v305
      %vm361 = vcmp.eq.f32.partialorder %v360, 8.507059e+37
      %v362 = vand.u32 %v305, 2147483648
      %v363 = vor.u32 1.1754944e-38, %v362
      %v364 = vsel %vm361, %v363, %v359
      %v365 = vmul.f32 1.0, %v364
      %v366 = vmul.f32 %v320, 1.0614054
      %v367 = vmul.f32 %v335, 1.0614054
      %v368 = vmul.f32 %v350, 1.0614054
      %v369 = vmul.f32 %v365, 1.0614054
      %v370 = vadd.f32 %v366, -1.4531521
      %v371 = vadd.f32 %v367, -1.4531521
      %v372 = vadd.f32 %v368, -1.4531521
      %v373 = vadd.f32 %v369, -1.4531521
      %v374 = vmul.f32 %v320, %v370
      %v375 = vmul.f32 %v335, %v371
      %v376 = vmul.f32 %v350, %v372
      %v377 = vmul.f32 %v365, %v373
      %v378 = vadd.f32 %v374, 1.4214138
      %v379 = vadd.f32 %v375, 1.4214138
      %v380 = vadd.f32 %v376, 1.4214138
      %v381 = vadd.f32 %v377, 1.4214138
      %v382 = vmul.f32 %v320, %v378
      %v383 = vmul.f32 %v335, %v379
      %v384 = vmul.f32 %v350, %v380
      %v385 = vmul.f32 %v365, %v381
      %v386 = vadd.f32 %v382, -0.28449672
      %v387 = vadd.f32 %v383, -0.28449672
      %v388 = vadd.f32 %v384, -0.28449672
      %v389 = vadd.f32 %v385, -0.28449672
      %v390 = vmul.f32 %v320, %v386
      %v391 = vmul.f32 %v335, %v387
      %v392 = vmul.f32 %v350, %v388
      %v393 = vmul.f32 %v365, %v389
      %v394 = vadd.f32 %v390, 0.2548296
      %v395 = vadd.f32 %v391, 0.2548296
      %v396 = vadd.f32 %v392, 0.2548296
      %v397 = vadd.f32 %v393, 0.2548296
      %v398 = vmul.f32 %v320, %v394
      %v399 = vmul.f32 %v335, %v395
      %v400 = vmul.f32 %v350, %v396
      %v401 = vmul.f32 %v365, %v397
      %v402 = vsub.f32 0.0, %v294
      %v403 = vsub.f32 0.0, %v295
      %v404 = vsub.f32 0.0, %v296
      %v405 = vsub.f32 0.0, %v297
      %v406 = vmul.f32 %v402, %v294
      %v407 = vmul.f32 %v403, %v295
      %v408 = vmul.f32 %v404, %v296
      %v409 = vmul.f32 %v405, %v297
      %v410 = vmul.f32 %v406, 1.442695
      %v411 = vpow.pop %v410
      %v412 = vmul.f32 %v407, 1.442695
      %v413 = vpow.pop %v412
      %v414 = vmul.f32 %v408, 1.442695
      %v415 = vpow.pop %v414
      %v416 = vmul.f32 %v409, 1.442695
      %v417 = vpow.pop %v416
      %v418 = vmul.f32 %v398, %v411
      %v419 = vmul.f32 %v399, %v413
      %v420 = vmul.f32 %v400, %v415
      %v421 = vmul.f32 %v401, %v417
      %v422 = vsub.f32 1.0, %v418
      %v423 = vsub.f32 1.0, %v419
      %v424 = vsub.f32 1.0, %v420
      %v425 = vsub.f32 1.0, %v421
      %vm426 = vcmp.lt.f32.partialorder %v290, 0.0
      %vm427 = vcmp.lt.f32.partialorder %v291, 0.0
      %vm428 = vcmp.lt.f32.partialorder %v292, 0.0
      %vm429 = vcmp.lt.f32.partialorder %v293, 0.0
      %v430 = vsub.f32 0.0, %v422
      %v431 = vsub.f32 0.0, %v423
      %v432 = vsub.f32 0.0, %v424
      %v433 = vsub.f32 0.0, %v425
      %v434 = vsel %vm426, %v430, %v422
      %v435 = vsel %vm427, %v431, %v423
      %v436 = vsel %vm428, %v432, %v424
      %v437 = vsel %vm429, %v433, %v425
      %v438 = vadd.f32 %v434, 1.0
      %v439 = vadd.f32 %v435, 1.0
      %v440 = vadd.f32 %v436, 1.0
      %v441 = vadd.f32 %v437, 1.0
      %v442 = vmul.f32 %v286, %v438
      %v443 = vmul.f32 %v287, %v439
      %v444 = vmul.f32 %v288, %v440
      %v445 = vmul.f32 %v289, %v441
      %v446 = vld [vmem:[%s1] sm:$0xff]
      %v447 = vld [vmem:[%s1 + $0x8] sm:$0xff]
      %v448 = vld [vmem:[%s1 + $0x10] sm:$0xff]
      %v449 = vld [vmem:[%s1 + $0x18] sm:$0xff]
      %vm450 = vcmask 261120
      %v452 = vsel %vm450, %v442, 0
      %v455 = vsel %vm450, %v443, 0
      %v458 = vsel %vm450, %v444, 0
      %v461 = vsel %vm450, %v445, 0
      %463 = vmatpush.msra.mxu0 0.0
      %464 = vmatpush.msra.mxu0 0.0
      %465 = vmatpush.msra.mxu0 0.0
      %466 = vmatpush.msra.mxu0 0.0
      %467 = vmatpush.msra.mxu0 0.0
      %468 = vmatpush.msra.mxu0 0.0
      %469 = vmatpush.msra.mxu0 0.0
      %470 = vmatpush.msra.mxu0 0.0
      %471 = vmatpush.msra.mxu0 0.0
      %472 = vmatpush.msra.mxu0 0.0
      %473 = vmatpush.msra.mxu0 0.0
      %474 = vmatpush.msra.mxu0 0.0
      %475 = vmatpush.msra.mxu0 %v449
      %476 = vmatpush.msra.mxu0 %v448
      %477 = vmatpush.msra.mxu0 %v447
      %478 = vmatpush.msra.mxu0 %v446
      %479 = vmatmul.f32.gmra.mxu0 %v452
      %v480 = vpop.f32.mrf.mxu0
      %v481 = vadd.f32 0.0, %v480
      %482 = vmatmul.f32.gmra.mxu0 %v455
      %v483 = vpop.f32.mrf.mxu0
      %v484 = vadd.f32 0.0, %v483
      %485 = vmatmul.f32.gmra.mxu0 %v458
      %v486 = vpop.f32.mrf.mxu0
      %v487 = vadd.f32 0.0, %v486
      %488 = vmatmul.f32.gmra.mxu0 %v461
      %v489 = vpop.f32.mrf.mxu0
      %v490 = vadd.f32 0.0, %v489
      %491 = vdwg.mxu0
      %vm492 = vcmask 523264
      %v493 = vsel %vm492, %v481, 0.0
      %494 = vadd.xlane.f32.xlu0 %v493
      %v495 = vpop.xlane.xlu0 %494
      %v496 = vsel %vm492, %v484, 0.0
      %497 = vadd.xlane.f32.xlu0 %v496
      %v498 = vpop.xlane.xlu0 %497
      %v499 = vsel %vm492, %v487, 0.0
      %500 = vadd.xlane.f32.xlu0 %v499
      %v501 = vpop.xlane.xlu0 %500
      %v502 = vsel %vm492, %v490, 0.0
      %503 = vadd.xlane.f32.xlu0 %v502
      %v504 = vpop.xlane.xlu0 %503
      %v505 = vrcp.pop 64.0
      %v506 = vmul.f32 64.0, %v505
      %v507 = vsub.f32 1.0, %v506
      %v508 = vmul.f32 %v505, %v507
      %v509 = vadd.f32 %v505, %v508
      %vm510 = vweird.f32 %v505
      %v511 = vsel %vm510, %v505, %v509
      %v512 = vmul.f32 %v495, %v511
      %v513 = vmul.f32 %v498, %v511
      %v514 = vmul.f32 %v501, %v511
      %v515 = vmul.f32 %v504, %v511
      %v516 = vsub.f32 %v481, %v512
      %v517 = vsub.f32 %v484, %v513
      %v518 = vsub.f32 %v487, %v514
      %v519 = vsub.f32 %v490, %v515
      %v520 = vmul.f32 %v516, %v516
      %v521 = vmul.f32 %v517, %v517
      %v522 = vmul.f32 %v518, %v518
      %v523 = vmul.f32 %v519, %v519
      %v524 = vsel %vm492, %v520, 0.0
      %525 = vadd.xlane.f32.xlu0 %v524
      %v526 = vpop.xlane.xlu0 %525
      %v527 = vsel %vm492, %v521, 0.0
      %528 = vadd.xlane.f32.xlu0 %v527
      %v529 = vpop.xlane.xlu0 %528
      %v530 = vsel %vm492, %v522, 0.0
      %531 = vadd.xlane.f32.xlu0 %v530
      %v532 = vpop.xlane.xlu0 %531
      %v533 = vsel %vm492, %v523, 0.0
      %534 = vadd.xlane.f32.xlu0 %v533
      %v535 = vpop.xlane.xlu0 %534
      %v536 = vmul.f32 %v526, %v511
      %v537 = vmul.f32 %v529, %v511
      %v538 = vmul.f32 %v532, %v511
      %v539 = vmul.f32 %v535, %v511
      %v540 = vadd.f32 %v536, 1e-05
      %v541 = vadd.f32 %v537, 1e-05
      %v542 = vadd.f32 %v538, 1e-05
      %v543 = vadd.f32 %v539, 1e-05
      %v544 = vrsqrt.pop %v540
      %v545 = vmul.f32 %v544, %v540
      %v546 = vmul.f32 %v545, %v544
      %v547 = vmul.f32 0.5, %v546
      %v548 = vsub.f32 1.5, %v547
      %v549 = vmul.f32 %v544, %v548
      %vm550 = vweird.f32 %v540
      %vm551 = vweird.f32 %v544
      %vm552 = vmor %vm550, %vm551
      %v553 = vsel %vm552, %v544, %v549
      %v554 = vrsqrt.pop %v541
      %v555 = vmul.f32 %v554, %v541
      %v556 = vmul.f32 %v555, %v554
      %v557 = vmul.f32 0.5, %v556
      %v558 = vsub.f32 1.5, %v557
      %v559 = vmul.f32 %v554, %v558
      %vm560 = vweird.f32 %v541
      %vm561 = vweird.f32 %v554
      %vm562 = vmor %vm560, %vm561
      %v563 = vsel %vm562, %v554, %v559
      %v564 = vrsqrt.pop %v542
      %v565 = vmul.f32 %v564, %v542
      %v566 = vmul.f32 %v565, %v564
      %v567 = vmul.f32 0.5, %v566
      %v568 = vsub.f32 1.5, %v567
      %v569 = vmul.f32 %v564, %v568
      %vm570 = vweird.f32 %v542
      %vm571 = vweird.f32 %v564
      %vm572 = vmor %vm570, %vm571
      %v573 = vsel %vm572, %v564, %v569
      %v574 = vrsqrt.pop %v543
      %v575 = vmul.f32 %v574, %v543
      %v576 = vmul.f32 %v575, %v574
      %v577 = vmul.f32 0.5, %v576
      %v578 = vsub.f32 1.5, %v577
      %v579 = vmul.f32 %v574, %v578
      %vm580 = vweird.f32 %v543
      %vm581 = vweird.f32 %v574
      %vm582 = vmor %vm580, %vm581
      %v583 = vsel %vm582, %v574, %v579
      %v584 = vmul.f32 %v516, %v553
      %v585 = vmul.f32 %v517, %v563
      %v586 = vmul.f32 %v518, %v573
      %v587 = vmul.f32 %v519, %v583
      %v588 = vld [vmem:[%s2] sm:$0x1]
      %v590 = vperm.slane %v588, 0
      %v592 = vmul.f32 %v584, %v590
      %v593 = vmul.f32 %v585, %v590
      %v594 = vmul.f32 %v586, %v590
      %v595 = vmul.f32 %v587, %v590
      %v596 = vld [vmem:[%s3] sm:$0x1]
      %v598 = vperm.slane %v596, 0
      %v600 = vadd.f32 %v592, %v598
      %v601 = vadd.f32 %v593, %v598
      %v602 = vadd.f32 %v594, %v598
      %v603 = vadd.f32 %v595, %v598
      %v604 = vmul.f32 %v600, 0.5
      %v605 = vmul.f32 %v601, 0.5
      %v606 = vmul.f32 %v602, 0.5
      %v607 = vmul.f32 %v603, 0.5
      %v608 = vmul.f32 %v600, 0.70710677
      %v609 = vmul.f32 %v601, 0.70710677
      %v610 = vmul.f32 %v602, 0.70710677
      %v611 = vmul.f32 %v603, 0.70710677
      %v612 = vand.u32 2147483647, %v608
      %v613 = vand.u32 2147483647, %v609
      %v614 = vand.u32 2147483647, %v610
      %v615 = vand.u32 2147483647, %v611
      %v616 = vmul.f32 %v612, 0.3275911
      %v617 = vmul.f32 %v613, 0.3275911
      %v618 = vmul.f32 %v614, 0.3275911
      %v619 = vmul.f32 %v615, 0.3275911
      %v620 = vadd.f32 %v616, 1.0
      %v621 = vadd.f32 %v617, 1.0
      %v622 = vadd.f32 %v618, 1.0
      %v623 = vadd.f32 %v619, 1.0
      %v624 = vrcp.pop %v620
      %v625 = vmul.f32 %v620, %v624
      %v626 = vsub.f32 1.0, %v625
      %v627 = vmul.f32 %v624, %v626
      %v628 = vadd.f32 %v624, %v627
      %vm629 = vweird.f32 %v620
      %vm630 = vweird.f32 %v624
      %vm631 = vmor %vm629, %vm630
      %v632 = vsel %vm631, %v624, %v628
      %v633 = vand.u32 2147483647, %v620
      %vm634 = vcmp.eq.f32.partialorder %v633, 8.507059e+37
      %v635 = vand.u32 %v620, 2147483648
      %v636 = vor.u32 1.1754944e-38, %v635
      %v637 = vsel %vm634, %v636, %v632
      %v638 = vmul.f32 1.0, %v637
      %v639 = vrcp.pop %v621
      %v640 = vmul.f32 %v621, %v639
      %v641 = vsub.f32 1.0, %v640
      %v642 = vmul.f32 %v639, %v641
      %v643 = vadd.f32 %v639, %v642
      %vm644 = vweird.f32 %v621
      %vm645 = vweird.f32 %v639
      %vm646 = vmor %vm644, %vm645
      %v647 = vsel %vm646, %v639, %v643
      %v648 = vand.u32 2147483647, %v621
      %vm649 = vcmp.eq.f32.partialorder %v648, 8.507059e+37
      %v650 = vand.u32 %v621, 2147483648
      %v651 = vor.u32 1.1754944e-38, %v650
      %v652 = vsel %vm649, %v651, %v647
      %v653 = vmul.f32 1.0, %v652
      %v654 = vrcp.pop %v622
      %v655 = vmul.f32 %v622, %v654
      %v656 = vsub.f32 1.0, %v655
      %v657 = vmul.f32 %v654, %v656
      %v658 = vadd.f32 %v654, %v657
      %vm659 = vweird.f32 %v622
      %vm660 = vweird.f32 %v654
      %vm661 = vmor %vm659, %vm660
      %v662 = vsel %vm661, %v654, %v658
      %v663 = vand.u32 2147483647, %v622
      %vm664 = vcmp.eq.f32.partialorder %v663, 8.507059e+37
      %v665 = vand.u32 %v622, 2147483648
      %v666 = vor.u32 1.1754944e-38, %v665
      %v667 = vsel %vm664, %v666, %v662
      %v668 = vmul.f32 1.0, %v667
      %v669 = vrcp.pop %v623
      %v670 = vmul.f32 %v623, %v669
      %v671 = vsub.f32 1.0, %v670
      %v672 = vmul.f32 %v669, %v671
      %v673 = vadd.f32 %v669, %v672
      %vm674 = vweird.f32 %v623
      %vm675 = vweird.f32 %v669
      %vm676 = vmor %vm674, %vm675
      %v677 = vsel %vm676, %v669, %v673
      %v678 = vand.u32 2147483647, %v623
      %vm679 = vcmp.eq.f32.partialorder %v678, 8.507059e+37
      %v680 = vand.u32 %v623, 2147483648
      %v681 = vor.u32 1.1754944e-38, %v680
      %v682 = vsel %vm679, %v681, %v677
      %v683 = vmul.f32 1.0, %v682
      %v684 = vmul.f32 %v638, 1.0614054
      %v685 = vmul.f32 %v653, 1.0614054
      %v686 = vmul.f32 %v668, 1.0614054
      %v687 = vmul.f32 %v683, 1.0614054
      %v688 = vadd.f32 %v684, -1.4531521
      %v689 = vadd.f32 %v685, -1.4531521
      %v690 = vadd.f32 %v686, -1.4531521
      %v691 = vadd.f32 %v687, -1.4531521
      %v692 = vmul.f32 %v638, %v688
      %v693 = vmul.f32 %v653, %v689
      %v694 = vmul.f32 %v668, %v690
      %v695 = vmul.f32 %v683, %v691
      %v696 = vadd.f32 %v692, 1.4214138
      %v697 = vadd.f32 %v693, 1.4214138
      %v698 = vadd.f32 %v694, 1.4214138
      %v699 = vadd.f32 %v695, 1.4214138
      %v700 = vmul.f32 %v638, %v696
      %v701 = vmul.f32 %v653, %v697
      %v702 = vmul.f32 %v668, %v698
      %v703 = vmul.f32 %v683, %v699
      %v704 = vadd.f32 %v700, -0.28449672
      %v705 = vadd.f32 %v701, -0.28449672
      %v706 = vadd.f32 %v702, -0.28449672
      %v707 = vadd.f32 %v703, -0.28449672
      %v708 = vmul.f32 %v638, %v704
      %v709 = vmul.f32 %v653, %v705
      %v710 = vmul.f32 %v668, %v706
      %v711 = vmul.f32 %v683, %v707
      %v712 = vadd.f32 %v708, 0.2548296
      %v713 = vadd.f32 %v709, 0.2548296
      %v714 = vadd.f32 %v710, 0.2548296
      %v715 = vadd.f32 %v711, 0.2548296
      %v716 = vmul.f32 %v638, %v712
      %v717 = vmul.f32 %v653, %v713
      %v718 = vmul.f32 %v668, %v714
      %v719 = vmul.f32 %v683, %v715
      %v720 = vsub.f32 0.0, %v612
      %v721 = vsub.f32 0.0, %v613
      %v722 = vsub.f32 0.0, %v614
      %v723 = vsub.f32 0.0, %v615
      %v724 = vmul.f32 %v720, %v612
      %v725 = vmul.f32 %v721, %v613
      %v726 = vmul.f32 %v722, %v614
      %v727 = vmul.f32 %v723, %v615
      %v728 = vmul.f32 %v724, 1.442695
      %v729 = vpow.pop %v728
      %v730 = vmul.f32 %v725, 1.442695
      %v731 = vpow.pop %v730
      %v732 = vmul.f32 %v726, 1.442695
      %v733 = vpow.pop %v732
      %v734 = vmul.f32 %v727, 1.442695
      %v735 = vpow.pop %v734
      %v736 = vmul.f32 %v716, %v729
      %v737 = vmul.f32 %v717, %v731
      %v738 = vmul.f32 %v718, %v733
      %v739 = vmul.f32 %v719, %v735
      %v740 = vsub.f32 1.0, %v736
      %v741 = vsub.f32 1.0, %v737
      %v742 = vsub.f32 1.0, %v738
      %v743 = vsub.f32 1.0, %v739
      %vm744 = vcmp.lt.f32.partialorder %v608, 0.0
      %vm745 = vcmp.lt.f32.partialorder %v609, 0.0
      %vm746 = vcmp.lt.f32.partialorder %v610, 0.0
      %vm747 = vcmp.lt.f32.partialorder %v611, 0.0
      %v748 = vsub.f32 0.0, %v740
      %v749 = vsub.f32 0.0, %v741
      %v750 = vsub.f32 0.0, %v742
      %v751 = vsub.f32 0.0, %v743
      %v752 = vsel %vm744, %v748, %v740
      %v753 = vsel %vm745, %v749, %v741
      %v754 = vsel %vm746, %v750, %v742
      %v755 = vsel %vm747, %v751, %v743
      %v756 = vadd.f32 %v752, 1.0
      %v757 = vadd.f32 %v753, 1.0
      %v758 = vadd.f32 %v754, 1.0
      %v759 = vadd.f32 %v755, 1.0
      %v760 = vmul.f32 %v604, %v756
      %v761 = vmul.f32 %v605, %v757
      %v762 = vmul.f32 %v606, %v758
      %v763 = vmul.f32 %v607, %v759
      %v764 = vld [vmem:[%s4] sm:$0xff]
      %v765 = vld [vmem:[%s4 + $0x8] sm:$0xff]
      %v766 = vld [vmem:[%s4 + $0x10] sm:$0xff]
      %v767 = vld [vmem:[%s4 + $0x18] sm:$0xff]
      %v768 = vld [vmem:[%s4 + $0x20] sm:$0xff]
      %v769 = vld [vmem:[%s4 + $0x28] sm:$0xff]
      %v770 = vld [vmem:[%s4 + $0x30] sm:$0xff]
      %v771 = vld [vmem:[%s4 + $0x38] sm:$0xff]
      %v773 = vsel %vm492, %v760, 0
      %v776 = vsel %vm492, %v761, 0
      %v779 = vsel %vm492, %v762, 0
      %v782 = vsel %vm492, %v763, 0
      %784 = vmatpush.msra.mxu0 0.0
      %785 = vmatpush.msra.mxu0 0.0
      %786 = vmatpush.msra.mxu0 0.0
      %787 = vmatpush.msra.mxu0 0.0
      %788 = vmatpush.msra.mxu0 0.0
      %789 = vmatpush.msra.mxu0 0.0
      %790 = vmatpush.msra.mxu0 0.0
      %791 = vmatpush.msra.mxu0 0.0
      %792 = vmatpush.msra.mxu0 %v771
      %793 = vmatpush.msra.mxu0 %v770
      %794 = vmatpush.msra.mxu0 %v769
      %795 = vmatpush.msra.mxu0 %v768
      %796 = vmatpush.msra.mxu0 %v767
      %797 = vmatpush.msra.mxu0 %v766
      %798 = vmatpush.msra.mxu0 %v765
      %799 = vmatpush.msra.mxu0 %v764
      %800 = vmatmul.f32.gmra.mxu0 %v773
      %v801 = vpop.f32.mrf.mxu0
      %v802 = vadd.f32 0.0, %v801
      %803 = vmatmul.f32.gmra.mxu0 %v776
      %v804 = vpop.f32.mrf.mxu0
      %v805 = vadd.f32 0.0, %v804
      %806 = vmatmul.f32.gmra.mxu0 %v779
      %v807 = vpop.f32.mrf.mxu0
      %v808 = vadd.f32 0.0, %v807
      %809 = vmatmul.f32.gmra.mxu0 %v782
      %v810 = vpop.f32.mrf.mxu0
      %v811 = vadd.f32 0.0, %v810
      %812 = vdwg.mxu0
      %v813 = vsel %vm450, %v802, 0.0
      %814 = vadd.xlane.f32.xlu0 %v813
      %v815 = vpop.xlane.xlu0 %814
      %v816 = vsel %vm450, %v805, 0.0
      %817 = vadd.xlane.f32.xlu0 %v816
      %v818 = vpop.xlane.xlu0 %817
      %v819 = vsel %vm450, %v808, 0.0
      %820 = vadd.xlane.f32.xlu0 %v819
      %v821 = vpop.xlane.xlu0 %820
      %v822 = vsel %vm450, %v811, 0.0
      %823 = vadd.xlane.f32.xlu0 %v822
      %v824 = vpop.xlane.xlu0 %823
      %v825 = vrcp.pop 32.0
      %v826 = vmul.f32 32.0, %v825
      %v827 = vsub.f32 1.0, %v826
      %v828 = vmul.f32 %v825, %v827
      %v829 = vadd.f32 %v825, %v828
      %vm830 = vweird.f32 %v825
      %v831 = vsel %vm830, %v825, %v829
      %v832 = vmul.f32 %v815, %v831
      %v833 = vmul.f32 %v818, %v831
      %v834 = vmul.f32 %v821, %v831
      %v835 = vmul.f32 %v824, %v831
      %v836 = vsub.f32 %v802, %v832
      %v837 = vsub.f32 %v805, %v833
      %v838 = vsub.f32 %v808, %v834
      %v839 = vsub.f32 %v811, %v835
      %v840 = vmul.f32 %v836, %v836
      %v841 = vmul.f32 %v837, %v837
      %v842 = vmul.f32 %v838, %v838
      %v843 = vmul.f32 %v839, %v839
      %v844 = vsel %vm450, %v840, 0.0
      %845 = vadd.xlane.f32.xlu0 %v844
      %v846 = vpop.xlane.xlu0 %845
      %v847 = vsel %vm450, %v841, 0.0
      %848 = vadd.xlane.f32.xlu0 %v847
      %v849 = vpop.xlane.xlu0 %848
      %v850 = vsel %vm450, %v842, 0.0
      %851 = vadd.xlane.f32.xlu0 %v850
      %v852 = vpop.xlane.xlu0 %851
      %v853 = vsel %vm450, %v843, 0.0
      %854 = vadd.xlane.f32.xlu0 %v853
      %v855 = vpop.xlane.xlu0 %854
      %v856 = vmul.f32 %v846, %v831
      %v857 = vmul.f32 %v849, %v831
      %v858 = vmul.f32 %v852, %v831
      %v859 = vmul.f32 %v855, %v831
      %v860 = vadd.f32 %v856, 1e-05
      %v861 = vadd.f32 %v857, 1e-05
      %v862 = vadd.f32 %v858, 1e-05
      %v863 = vadd.f32 %v859, 1e-05
      %v864 = vrsqrt.pop %v860
      %v865 = vmul.f32 %v864, %v860
      %v866 = vmul.f32 %v865, %v864
      %v867 = vmul.f32 0.5, %v866
      %v868 = vsub.f32 1.5, %v867
      %v869 = vmul.f32 %v864, %v868
      %vm870 = vweird.f32 %v860
      %vm871 = vweird.f32 %v864
      %vm872 = vmor %vm870, %vm871
      %v873 = vsel %vm872, %v864, %v869
      %v874 = vrsqrt.pop %v861
      %v875 = vmul.f32 %v874, %v861
      %v876 = vmul.f32 %v875, %v874
      %v877 = vmul.f32 0.5, %v876
      %v878 = vsub.f32 1.5, %v877
      %v879 = vmul.f32 %v874, %v878
      %vm880 = vweird.f32 %v861
      %vm881 = vweird.f32 %v874
      %vm882 = vmor %vm880, %vm881
      %v883 = vsel %vm882, %v874, %v879
      %v884 = vrsqrt.pop %v862
      %v885 = vmul.f32 %v884, %v862
      %v886 = vmul.f32 %v885, %v884
      %v887 = vmul.f32 0.5, %v886
      %v888 = vsub.f32 1.5, %v887
      %v889 = vmul.f32 %v884, %v888
      %vm890 = vweird.f32 %v862
      %vm891 = vweird.f32 %v884
      %vm892 = vmor %vm890, %vm891
      %v893 = vsel %vm892, %v884, %v889
      %v894 = vrsqrt.pop %v863
      %v895 = vmul.f32 %v894, %v863
      %v896 = vmul.f32 %v895, %v894
      %v897 = vmul.f32 0.5, %v896
      %v898 = vsub.f32 1.5, %v897
      %v899 = vmul.f32 %v894, %v898
      %vm900 = vweird.f32 %v863
      %vm901 = vweird.f32 %v894
      %vm902 = vmor %vm900, %vm901
      %v903 = vsel %vm902, %v894, %v899
      %v904 = vmul.f32 %v836, %v873
      %v905 = vmul.f32 %v837, %v883
      %v906 = vmul.f32 %v838, %v893
      %v907 = vmul.f32 %v839, %v903
      %v908 = vld [vmem:[%s5] sm:$0x1]
      %v910 = vperm.slane %v908, 0
      %v912 = vmul.f32 %v904, %v910
      %v913 = vmul.f32 %v905, %v910
      %v914 = vmul.f32 %v906, %v910
      %v915 = vmul.f32 %v907, %v910
      %v916 = vld [vmem:[%s6] sm:$0x1]
      %v918 = vperm.slane %v916, 0
      %v920 = vadd.f32 %v912, %v918
      %v921 = vadd.f32 %v913, %v918
      %v922 = vadd.f32 %v914, %v918
      %v923 = vadd.f32 %v915, %v918
      %924 = vst.msk [vmem:[%s280] sm:$0xff] %vm450, %v920
      %925 = vst.msk [vmem:[%s280 + $0x8] sm:$0xff] %vm450, %v921
      %926 = vst.msk [vmem:[%s280 + $0x10] sm:$0xff] %vm450, %v922
      %927 = vst.msk [vmem:[%s280 + $0x18] sm:$0xff] %vm450, %v923
      %s928 = smul.u32 4, %s18
      %p929 = scmp.lt.s32.totalorder %s928, 7
      %s930 = scalar_select %p929, %s928, 7
      %s931 = smul.addr %s930, 8
      %s932 = scalar_lea.vmem %s7, %s931
      // Predicated region
      $region49: #{_lambda_.1} parent=47 // pred_check
        %p933 = pneg %p188
      $region50: #{_lambda_.1} parent=47 // pred_check_branch
        %935 = sbr.rel (%p933) target = $region52
      $region51: #{_lambda_.1} parent=47 // pred_region
        %s936 = smul.u32 4, %s18
      $region52: #{_lambda_.1} parent=47 // pred_fallthru
        _
    $region48: #{_lambda_.1} parent=5 // pred_fallthru
      _
    %p937 = scmp.le.s32.totalorder 2, %s13
    // Predicated region
    $region53: #{_lambda_.1} parent=5 // pred_check
      %p938 = pneg %p937
    $region54: #{_lambda_.1} parent=5 // pred_check_branch
      %940 = sbr.rel (%p938) target = $region56
    $region55: #{_lambda_.1} parent=5 // pred_region
      %s941 = ssub.s32 %s13, 2
      // Predicated region
      $region57: #{_lambda_.1} parent=55 // pred_check
        %p942 = pneg %p194
      $region58: #{_lambda_.1} parent=55 // pred_check_branch
        %944 = sbr.rel (%p942) target = $region60
      $region59: #{_lambda_.1} parent=55 // pred_region
        %s945 = smul.u32 4, %s19
        %p946 = scmp.lt.s32.totalorder %s945, 7
        %s947 = scalar_select %p946, %s945, 7
        %s948 = smul.addr %s947, 8
        %s949 = scalar_lea.vmem %s7, %s948
      $region60: #{_lambda_.1} parent=55 // pred_fallthru
        _
    $region56: #{_lambda_.1} parent=5 // pred_fallthru
      _
  $region6: #{_lambda_.1} parent=0 // loop_footer
    %s17 = sadd.s32 1, %s13
  $region7: #{_lambda_.1} parent=0 // loop_footer_branch
    %12 = sbr.rel target = $region3
  $region8: #{_lambda_.1} parent=0 // loop_exit
    _

</llo_original>
